<compile_context>
chip_gen: v5e
topology: v5e:2x2
jax: 0.10.0
libtpu: 0.0.40
codegen_flags: <defaults>
</compile_context>

<pallas_src>
import math
from functools import partial

import jax
import jax.numpy as jnp
from jax import lax
from jax.experimental import pallas as pl
from jax.experimental.pallas import tpu as pltpu

COMPUTE_DTYPE = jnp.bfloat16  # MXU operand / activation storage dtype (f32 accumulation)


# ----------------------------- helpers -----------------------------

def _pick_tile(dim, target):
    """Largest usable tile: full dim if small / non-divisible, else the target tile."""
    if dim <= target:
        return dim
    return target if dim % target == 0 else dim


# ----------------------------- tiled fused dense -----------------------------

def _dense_kernel(x_ref, w_ref, b_ref, o_ref, acc_ref, *, act):
    k = pl.program_id(2)

    @pl.when(k == 0)
    def _():
        acc_ref[...] = jnp.zeros_like(acc_ref)

    acc_ref[...] += jnp.dot(x_ref[...], w_ref[...], preferred_element_type=jnp.float32)

    @pl.when(k == pl.num_programs(2) - 1)
    def _():
        y = acc_ref[...] + b_ref[...]
        if act == "gelu":
            # TODO(synk): reference BERT gelu uses erf; tanh approximation used here (~1e-3 diff).
            y = 0.5 * y * (1.0 + jnp.tanh(0.7978845608028654 * (y + 0.044715 * y * y * y)))
        elif act == "tanh":
            y = jnp.tanh(y)
        elif act == "sigmoid":
            y = 1.0 / (1.0 + jnp.exp(-y))
        o_ref[...] = y.astype(o_ref.dtype)


def dense(x2d, w, b, act="none", out_dtype=None, tm=256, tn=512, tk=512):
    """y = act(x @ w + b).  Tiled over (M, N, K); conservative tiles fit 64MiB (v7x) VMEM."""
    m, kdim = x2d.shape
    n = w.shape[1]
    out_dtype = out_dtype or COMPUTE_DTYPE
    tm = _pick_tile(m, tm)
    tn = _pick_tile(n, tn)
    tk = _pick_tile(kdim, tk)
    grid = (m // tm, n // tn, kdim // tk)
    return pl.pallas_call(
        partial(_dense_kernel, act=act),
        out_shape=jax.ShapeDtypeStruct((m, n), out_dtype),
        grid=grid,
        in_specs=[
            pl.BlockSpec((tm, tk), lambda i, j, k: (i, k)),
            pl.BlockSpec((tk, tn), lambda i, j, k: (k, j)),
            pl.BlockSpec((1, tn), lambda i, j, k: (0, j)),
        ],
        out_specs=pl.BlockSpec((tm, tn), lambda i, j, k: (i, j)),
        scratch_shapes=[pltpu.VMEM((tm, tn), jnp.float32)],
        compiler_params=pltpu.CompilerParams(
            dimension_semantics=("parallel", "parallel", "arbitrary")),
    )(x2d.astype(COMPUTE_DTYPE), w.astype(COMPUTE_DTYPE),
      b.reshape(1, n).astype(jnp.float32))


# ----------------------------- layernorm (optionally fused with residual) -----------------------------

def _ln_kernel(x_ref, g_ref, b_ref, o_ref):
    x = x_ref[...].astype(jnp.float32)
    mu = jnp.mean(x, axis=-1, keepdims=True)
    var = jnp.mean((x - mu) ** 2, axis=-1, keepdims=True)
    inv = lax.rsqrt(var + 1e-12)
    o_ref[...] = ((x - mu) * inv * g_ref[...] + b_ref[...]).astype(o_ref.dtype)


def _add_ln_kernel(x_ref, y_ref, g_ref, b_ref, o_ref):
    x = x_ref[...].astype(jnp.float32) + y_ref[...].astype(jnp.float32)
    mu = jnp.mean(x, axis=-1, keepdims=True)
    var = jnp.mean((x - mu) ** 2, axis=-1, keepdims=True)
    inv = lax.rsqrt(var + 1e-12)
    o_ref[...] = ((x - mu) * inv * g_ref[...] + b_ref[...]).astype(o_ref.dtype)


def _ln_common(kernel, tensors, n, d, out_dtype, rows_tile=512):
    tm = _pick_tile(n, rows_tile)
    grid = (n // tm,)
    row_spec = pl.BlockSpec((tm, d), lambda i: (i, 0))
    vec_spec = pl.BlockSpec((1, d), lambda i: (0, 0))
    in_specs = [row_spec] * (len(tensors)) + [vec_spec, vec_spec]
    return pl.pallas_call(
        kernel,
        out_shape=jax.ShapeDtypeStruct((n, d), out_dtype),
        grid=grid,
        in_specs=in_specs,
        out_specs=row_spec,
        compiler_params=pltpu.CompilerParams(dimension_semantics=("parallel",)),
    )


def layernorm(x2d, gamma, beta, out_dtype=COMPUTE_DTYPE):
    n, d = x2d.shape
    call = _ln_common(_ln_kernel, (x2d,), n, d, out_dtype)
    return call(x2d, gamma.reshape(1, d).astype(jnp.float32),
                beta.reshape(1, d).astype(jnp.float32))


def add_layernorm(x2d, y2d, gamma, beta, out_dtype=COMPUTE_DTYPE):
    """LayerNorm(x + y) with the residual add fused into the kernel (single HBM pass)."""
    n, d = x2d.shape
    call = _ln_common(_add_ln_kernel, (x2d, y2d), n, d, out_dtype)
    return call(x2d, y2d, gamma.reshape(1, d).astype(jnp.float32),
                beta.reshape(1, d).astype(jnp.float32))


# ----------------------------- attention core -----------------------------

def _make_attn_kernel(num_heads, dh, scale):
    def kernel(q_ref, k_ref, v_ref, m_ref, o_ref):
        m = m_ref[0]  # (1, L) additive mask (f32)
        for h in range(num_heads):  # static unroll; per-head slices stay inside VMEM
            sl = slice(h * dh, (h + 1) * dh)
            q = q_ref[0, :, sl]   # (L, dh) bf16
            k = k_ref[0, :, sl]
            v = v_ref[0, :, sl]
            # scores: contract over dh without materializing K^T
            s = lax.dot_general(q, k, (((1,), (1,)), ((), ())),
                                preferred_element_type=jnp.float32)
            s = s * scale + m
            s = s - jnp.max(s, axis=-1, keepdims=True)
            p = jnp.exp(s)
            p = p * pl.reciprocal(jnp.sum(p, axis=-1, keepdims=True), approx=True)
            ctx = jnp.dot(p.astype(v.dtype), v, preferred_element_type=jnp.float32)
            o_ref[0, :, sl] = ctx.astype(o_ref.dtype)
    return kernel


def attention_core(q, k, v, mask_add, num_heads):
    # q,k,v: (B, L, D) head-interleaved (no HBM head transposes); mask_add: (B, 1, L) additive.
    B, L, D = q.shape
    dh = D // num_heads
    qkv_spec = pl.BlockSpec((1, L, D), lambda b: (b, 0, 0))
    m_spec = pl.BlockSpec((1, 1, L), lambda b: (b, 0, 0))
    # TODO(synk): for long sequences, block over the query length (flash-style) instead of
    # loading the full (L, D) tile per batch.
    return pl.pallas_call(
        _make_attn_kernel(num_heads, dh, 1.0 / math.sqrt(dh)),
        out_shape=jax.ShapeDtypeStruct((B, L, D), COMPUTE_DTYPE),
        grid=(B,),
        in_specs=[qkv_spec, qkv_spec, qkv_spec, m_spec],
        out_specs=qkv_spec,
        compiler_params=pltpu.CompilerParams(dimension_semantics=("parallel",)),
    )(q.astype(COMPUTE_DTYPE), k.astype(COMPUTE_DTYPE), v.astype(COMPUTE_DTYPE),
      mask_add.astype(jnp.float32))


# ----------------------------- batched classifier heads -----------------------------

def _classifier_kernel(x_ref, w_ref, b_ref, o_ref):
    y = jnp.dot(x_ref[0], w_ref[0], preferred_element_type=jnp.float32) + b_ref[0]
    o_ref[0] = 1.0 / (1.0 + jnp.exp(-y))


def classifiers(pooled_list, param_list):
    # All four Tagging_Classifier heads (Linear -> Dropout(eval=identity) -> Sigmoid) in one call.
    x = jnp.stack([p.astype(COMPUTE_DTYPE) for p in pooled_list], axis=0)            # (H, B, D)
    w = jnp.stack([pp["w"].astype(COMPUTE_DTYPE) for pp in param_list], axis=0)      # (H, D, C)
    b = jnp.stack([pp["b"].astype(jnp.float32).reshape(1, -1) for pp in param_list], axis=0)
    nh, B, D = x.shape
    C = w.shape[-1]
    return pl.pallas_call(
        _classifier_kernel,
        out_shape=jax.ShapeDtypeStruct((nh, B, C), jnp.float32),
        grid=(nh,),
        in_specs=[pl.BlockSpec((1, B, D), lambda i: (i, 0, 0)),
                  pl.BlockSpec((1, D, C), lambda i: (i, 0, 0)),
                  pl.BlockSpec((1, 1, C), lambda i: (i, 0, 0))],
        out_specs=pl.BlockSpec((1, B, C), lambda i: (i, 0, 0)),
        compiler_params=pltpu.CompilerParams(dimension_semantics=("parallel",)),
    )(x, w, b)


# ----------------------------- parameter init -----------------------------

def init_linear(key, din, dout):
    return {"w": jax.random.normal(key, (din, dout), jnp.float32) * 0.02,
            "b": jnp.zeros((dout,), jnp.float32)}


def init_ln(d):
    return {"g": jnp.ones((d,), jnp.float32), "b": jnp.zeros((d,), jnp.float32)}


def init_layer(key, d, dff):
    ks = jax.random.split(key, 4)
    return {
        "qkv": init_linear(ks[0], d, 3 * d),     # fused Q|K|V projection
        "attn_out": init_linear(ks[1], d, d),
        "ln1": init_ln(d),
        "inter": init_linear(ks[2], d, dff),
        "ffn_out": init_linear(ks[3], dff, d),
        "ln2": init_ln(d),
    }


def init_encoder(key, n_layers, d, dff):
    return [init_layer(k, d, dff) for k in jax.random.split(key, n_layers)]


def init_model(key, cfg):
    D, Dff = cfg["hidden"], cfg["intermediate"]
    ks = iter(jax.random.split(key, 64))
    nk = lambda: next(ks)

    def init_bert():
        return {
            "emb": {
                "word_emb": jax.random.normal(nk(), (cfg["vocab"], D), jnp.float32) * 0.02,
                "pos_emb": jax.random.normal(nk(), (cfg["max_pos"], D), jnp.float32) * 0.02,
                "type_emb": jax.random.normal(nk(), (2, D), jnp.float32) * 0.02,
                "ln": init_ln(D),
            },
            "layers": init_encoder(nk(), cfg["layers"], D, Dff),
            "pooler": init_linear(nk(), D, D),
        }

    def init_feat_model(feat_dim):
        return {
            "emb": {
                "word_emb": init_linear(nk(), feat_dim, D),   # linear feature embedding
                "pos_emb": jax.random.normal(nk(), (cfg["max_pos"], D), jnp.float32) * 0.02,
                "ln": init_ln(D),
            },
            "layers": init_encoder(nk(), cfg["layers"], D, Dff),
            "pooler": init_linear(nk(), D, D),
        }

    def init_cross():
        return {
            "emb": {
                "pos_emb": jax.random.normal(nk(), (cfg["max_pos"], D), jnp.float32) * 0.02,
                "type_emb": jax.random.normal(nk(), (2, D), jnp.float32) * 0.02,
                "ln": init_ln(D),
            },
            "layers": init_encoder(nk(), cfg["layers"], D, Dff),
            "pooler": init_linear(nk(), D, D),
        }

    return {
        "bert": init_bert(),
        "visual": init_feat_model(cfg["video_dim"]),
        "audio": init_feat_model(cfg["audio_dim"]),
        "va_cross": init_cross(),
        "cross": init_cross(),
        "cross_cls": init_linear(nk(), D, cfg["num_labels"]),
        "text_cls": init_linear(nk(), D, cfg["num_labels"]),
        "visual_cls": init_linear(nk(), D, cfg["num_labels"]),
        "audio_cls": init_linear(nk(), D, cfg["num_labels"]),
        "norm_video": init_ln(cfg["video_dim"]),
        "norm_audio": init_ln(cfg["audio_dim"]),
    }


# ----------------------------- model forward -----------------------------

def mha(x, mask_add, p, num_heads):
    B, L, D = x.shape
    x2 = x.reshape(B * L, D)
    qkv = dense(x2, p["qkv"]["w"], p["qkv"]["b"]).reshape(B, L, 3 * D)
    q, k, v = qkv[..., :D], qkv[..., D:2 * D], qkv[..., 2 * D:]
    ctx = attention_core(q, k, v, mask_add, num_heads)          # (B, L, D)
    return dense(ctx.reshape(B * L, D), p["attn_out"]["w"], p["attn_out"]["b"])


def encoder(x, mask_add, layers, num_heads):
    B, L, D = x.shape
    h = x.reshape(B * L, D)
    for p in layers:
        attn_out = mha(h.reshape(B, L, D), mask_add, p, num_heads)
        h = add_layernorm(h, attn_out, p["ln1"]["g"], p["ln1"]["b"])
        inter = dense(h, p["inter"]["w"], p["inter"]["b"], act="gelu")
        ffn = dense(inter, p["ffn_out"]["w"], p["ffn_out"]["b"])
        h = add_layernorm(h, ffn, p["ln2"]["g"], p["ln2"]["b"])
    return h.reshape(B, L, D)


def pooler(seq_out, p):
    return dense(seq_out[:, 0, :], p["w"], p["b"], act="tanh")


def _additive_mask(mask):
    return ((1.0 - mask.astype(jnp.float32)) * -10000.0)[:, None, :]   # (B, 1, L)


def bert_forward(input_ids, attn_mask, params, num_heads):
    B, L = input_ids.shape
    pe = params["emb"]
    we = jnp.take(pe["word_emb"], input_ids, axis=0)
    emb = we + pe["pos_emb"][:L][None, :, :] + pe["type_emb"][0][None, None, :]
    D = emb.shape[-1]
    emb = layernorm(emb.reshape(B * L, D), pe["ln"]["g"], pe["ln"]["b"]).reshape(B, L, D)
    seq = encoder(emb, _additive_mask(attn_mask), params["layers"], num_heads)
    return seq, pooler(seq, params["pooler"])


def feat_model_forward(feats, mask, params, num_heads):
    B, L, Df = feats.shape
    pe = params["emb"]
    we = dense(feats.reshape(B * L, Df), pe["word_emb"]["w"], pe["word_emb"]["b"])
    D = we.shape[-1]
    emb = we.reshape(B, L, D).astype(jnp.float32) + pe["pos_emb"][:L][None, :, :]
    emb = layernorm(emb.reshape(B * L, D), pe["ln"]["g"], pe["ln"]["b"]).reshape(B, L, D)
    seq = encoder(emb, _additive_mask(mask), params["layers"], num_heads)
    return seq, pooler(seq, params["pooler"])


def cross_forward(feats, type_ids, mask, params, num_heads):
    B, L, D = feats.shape
    pe = params["emb"]
    te = jnp.take(pe["type_emb"], type_ids.astype(jnp.int32), axis=0)
    emb = feats.astype(jnp.float32) + pe["pos_emb"][:L][None, :, :] + te
    emb = layernorm(emb.reshape(B * L, D), pe["ln"]["g"], pe["ln"]["b"]).reshape(B, L, D)
    seq = encoder(emb, _additive_mask(mask), params["layers"], num_heads)
    return seq, pooler(seq, params["pooler"])


def normalize_feats(x, ln):
    # NormalizeVideo / NormalizeAudio: view(-1, L, D) then LayerNorm over last dim.
    x = x.astype(jnp.float32)
    L, D = x.shape[-2], x.shape[-1]
    x = x.reshape(-1, L, D)
    return layernorm(x.reshape(-1, D), ln["g"], ln["b"]).reshape(-1, L, D)


def tagging_univl_forward(params, cfg, input_ids, attention_mask,
                          video, video_mask, audio, audio_mask):
    input_ids = input_ids.reshape(-1, input_ids.shape[-1])
    attention_mask = attention_mask.reshape(-1, attention_mask.shape[-1])
    video_mask = video_mask.reshape(-1, video_mask.shape[-1])
    audio_mask = audio_mask.reshape(-1, audio_mask.shape[-1])

    video = normalize_feats(video, params["norm_video"])
    audio = normalize_feats(audio, params["norm_audio"])

    heads = cfg["heads"]
    text_out, text_pooled = bert_forward(input_ids, attention_mask, params["bert"], heads)
    vis_out, vis_pooled = feat_model_forward(video, video_mask, params["visual"], heads)
    aud_out, aud_pooled = feat_model_forward(audio, audio_mask, params["audio"], heads)

    # _get_cross_output
    va_feats = jnp.concatenate([aud_out, vis_out], axis=1)
    va_mask = jnp.concatenate([audio_mask, video_mask], axis=1)
    va_type = jnp.concatenate([jnp.zeros_like(audio_mask), jnp.ones_like(video_mask)], axis=1)
    va_seq, _ = cross_forward(va_feats, va_type, va_mask, params["va_cross"], heads)

    vat_feats = jnp.concatenate([text_out, va_seq], axis=1)
    vat_mask = jnp.concatenate([attention_mask, va_mask], axis=1)
    vat_type = jnp.concatenate([jnp.zeros_like(attention_mask), jnp.ones_like(va_mask)], axis=1)
    _, vat_pooled = cross_forward(vat_feats, vat_type, vat_mask, params["cross"], heads)

    # all 4 Tagging_Classifier heads in a single batched pallas_call
    scores = classifiers(
        [vat_pooled, text_pooled, vis_pooled, aud_pooled],
        [params["cross_cls"], params["text_cls"], params["visual_cls"], params["audio_cls"]])
    cross_scores, text_scores, vis_scores, aud_scores = scores[0], scores[1], scores[2], scores[3]

    predict_scores = 0.5 * ((text_scores + vis_scores + aud_scores) / 3.0) + 0.5 * cross_scores
    # TODO(synk): training-branch Focalloss / calculate_gap and do_pretrain MLM/MFM/NCE losses
    # rely on functions not defined in the reference snippet; inference scoring path only.
    return predict_scores


# ----------------------------- main -----------------------------

if __name__ == "__main__":
    cfg = dict(hidden=32, intermediate=64, heads=4, layers=1, vocab=64,
               max_pos=64, video_dim=32, audio_dim=32, num_labels=10)
    key = jax.random.PRNGKey(0)
    k_param, k_ids, k_vid, k_aud = jax.random.split(key, 4)
    params = init_model(k_param, cfg)

    B, Lt, Lv, La = 2, 8, 8, 8
    input_ids = jax.random.randint(k_ids, (B, Lt), 0, cfg["vocab"])
    attention_mask = jnp.ones((B, Lt), jnp.float32)
    video = jax.random.normal(k_vid, (B, Lv, cfg["video_dim"]), jnp.float32)
    video_mask = jnp.ones((B, Lv), jnp.float32)
    audio = jax.random.normal(k_aud, (B, La, cfg["audio_dim"]), jnp.float32)
    audio_mask = jnp.ones((B, La), jnp.float32)

    scores = tagging_univl_forward(params, cfg, input_ids, attention_mask,
                                   video, video_mask, audio, audio_mask)
    jax.block_until_ready(scores)
    assert scores.shape == (B, cfg["num_labels"])
    assert bool(jnp.all((scores >= 0.0) & (scores <= 1.0)))
    print("KERNEL_OK")
</pallas_src>

<mosaic_0001>
module attributes {stable_mosaic.version = 11 : i64} {
  func.func @_ln_kernel(%arg0: i32, %arg1: memref<16x32xf32, #tpu.memory_space<vmem>>, %arg2: memref<1x32xf32, #tpu.memory_space<vmem>>, %arg3: memref<1x32xf32, #tpu.memory_space<vmem>>, %arg4: memref<16x32xbf16, #tpu.memory_space<vmem>>) attributes {dimension_semantics = [#tpu.dimension_semantics<parallel>], iteration_bounds = array<i64: 1>, scalar_prefetch = 0 : i64, scratch_operands = 0 : i64, tpu.core_type = #tpu.core_type<tc>, window_params = [{transform_indices = @transform_0, window_bounds = array<i64: 16, 32>}, {pipeline_mode = #tpu.pipeline_mode<synchronous>, transform_indices = @transform_1, window_bounds = array<i64: 1, 32>}, {pipeline_mode = #tpu.pipeline_mode<synchronous>, transform_indices = @transform_2, window_bounds = array<i64: 1, 32>}, {transform_indices = @transform_3, window_bounds = array<i64: 16, 32>}]} {
    %c0 = arith.constant 0 : index
    %c0_0 = arith.constant 0 : index
    %0 = vector.load %arg1[%c0, %c0_0] : memref<16x32xf32, #tpu.memory_space<vmem>>, vector<16x32xf32>
    %cst = arith.constant dense<0.000000e+00> : vector<16xf32>
    %1 = vector.multi_reduction <add>, %0, %cst [1] : vector<16x32xf32> to vector<16xf32>
    %2 = vector.shape_cast %1 : vector<16xf32> to vector<16x1xf32>
    %cst_1 = arith.constant 3.200000e+01 : f32
    %3 = vector.broadcast %cst_1 : f32 to vector<16x1xf32>
    %4 = arith.divf %2, %3 : vector<16x1xf32>
    %5 = vector.broadcast %4 : vector<16x1xf32> to vector<16x32xf32>
    %6 = arith.subf %0, %5 : vector<16x32xf32>
    %7 = arith.mulf %6, %6 : vector<16x32xf32>
    %cst_2 = arith.constant dense<0.000000e+00> : vector<16xf32>
    %8 = vector.multi_reduction <add>, %7, %cst_2 [1] : vector<16x32xf32> to vector<16xf32>
    %9 = vector.shape_cast %8 : vector<16xf32> to vector<16x1xf32>
    %cst_3 = arith.constant 3.200000e+01 : f32
    %10 = vector.broadcast %cst_3 : f32 to vector<16x1xf32>
    %11 = arith.divf %9, %10 : vector<16x1xf32>
    %cst_4 = arith.constant 9.99999996E-13 : f32
    %12 = vector.broadcast %cst_4 : f32 to vector<16x1xf32>
    %13 = arith.addf %11, %12 : vector<16x1xf32>
    %14 = math.rsqrt %13 : vector<16x1xf32>
    %15 = vector.broadcast %4 : vector<16x1xf32> to vector<16x32xf32>
    %16 = arith.subf %0, %15 : vector<16x32xf32>
    %17 = vector.broadcast %14 : vector<16x1xf32> to vector<16x32xf32>
    %18 = arith.mulf %16, %17 : vector<16x32xf32>
    %c0_5 = arith.constant 0 : index
    %c0_6 = arith.constant 0 : index
    %19 = vector.load %arg2[%c0_5, %c0_6] : memref<1x32xf32, #tpu.memory_space<vmem>>, vector<1x32xf32>
    %20 = vector.broadcast %19 : vector<1x32xf32> to vector<16x32xf32>
    %21 = arith.mulf %18, %20 : vector<16x32xf32>
    %c0_7 = arith.constant 0 : index
    %c0_8 = arith.constant 0 : index
    %22 = vector.load %arg3[%c0_7, %c0_8] : memref<1x32xf32, #tpu.memory_space<vmem>>, vector<1x32xf32>
    %23 = vector.broadcast %22 : vector<1x32xf32> to vector<16x32xf32>
    %24 = arith.addf %21, %23 : vector<16x32xf32>
    %25 = arith.truncf %24 : vector<16x32xf32> to vector<16x32xbf16>
    %c0_9 = arith.constant 0 : index
    %c0_10 = arith.constant 0 : index
    %26 = vector.load %arg4[%c0_9, %c0_10] : memref<16x32xbf16, #tpu.memory_space<vmem>>, vector<16x32xbf16>
    tpu.vector_store %arg4[%c0_9, %c0_10], %25 {strides = array<i32>} : memref<16x32xbf16, #tpu.memory_space<vmem>>, vector<16x32xbf16>,
    return
  }
  func.func @transform_0(%arg0: i32) -> (i32, i32) {
    %c0_i32 = arith.constant 0 : i32
    %c0_i32_0 = arith.constant 0 : i32
    return %arg0, %c0_i32 : i32, i32
  }
  func.func @transform_1(%arg0: i32) -> (i32, i32) {
    %c0_i32 = arith.constant 0 : i32
    %c0_i32_0 = arith.constant 0 : i32
    %c0_i32_1 = arith.constant 0 : i32
    return %c0_i32, %c0_i32_0 : i32, i32
  }
  func.func @transform_2(%arg0: i32) -> (i32, i32) {
    %c0_i32 = arith.constant 0 : i32
    %c0_i32_0 = arith.constant 0 : i32
    %c0_i32_1 = arith.constant 0 : i32
    return %c0_i32, %c0_i32_0 : i32, i32
  }
  func.func @transform_3(%arg0: i32) -> (i32, i32) {
    %c0_i32 = arith.constant 0 : i32
    %c0_i32_0 = arith.constant 0 : i32
    return %arg0, %c0_i32 : i32, i32
  }
}

</mosaic_0001>

<llo_original>
// kernel: tpu_custom_call.1
$region0: #{tpu_custom_call.1}
  #allocation0 [shape = 'u32[]', space=smem, size = 0x4, offset = 0x4, fixed_abs, tag = 'smem constant byte address 0x4 - core index']
  #allocation1 [shape = 'u32[72,128]{1,0:T(1,128)}', space=vmem, size = 0x9000, scoped, tag = 'internal scratch']
  %s0 = inlined_call_operand.hbm [shape: f32[16,32], index: 0, kind: input, shape index: {}]
  %s1 = inlined_call_operand.hbm [shape: f32[1,32], index: 1, kind: input, shape index: {}]
  %s2 = inlined_call_operand.vmem [shape: f32[1,32], index: 2, kind: input, shape index: {}]
  %s3 = inlined_call_operand.hbm [shape: bf16[16,32], index: 3, kind: output, shape index: {}]
  %s4 = sld [smem:[#allocation0]]
  $region30: #{tpu_custom_call.1} parent=0
    _
  %s6 = ssub.s32 1, %s4
  %s7 = scalar_select 0, %s6, %s4
  $region1: #{tpu_custom_call.1} parent=0
    #allocation2 [shape = 'u8[8192]{0}', space=vmem, size = 0x2000, scoped, tag = 'input window, operand 0, single buffered']
    #allocation3 [shape = 's32[1]{0}', space=sflag, size = 0x4, scoped, tag = 'scoped memory for tpu_custom_call.1']
    #allocation4 [shape = 's32[1]{0}', space=sflag, size = 0x4, scoped, tag = 'scoped memory for tpu_custom_call.1']
    #allocation5 [shape = 'u8[512]{0}', space=vmem, size = 0x400, scoped, tag = 'input window, operand 1, single buffered']
    #allocation6 [shape = 's32[1]{0}', space=sflag, size = 0x4, scoped, tag = 'scoped memory for tpu_custom_call.1']
    #allocation7 [shape = 'u8[4096]{0}', space=vmem, size = 0x1000, scoped, tag = 'output window, operand 0, single buffered']
    %8 = vsyncpa [#allocation3], 0
    %9 = vsyncpa [#allocation6], 0
    %10 = vsyncpa [#allocation4], 0
    // Predicated region
    $region2: #{tpu_custom_call.1} parent=1 // pred_check
      _
    $region3: #{tpu_custom_call.1} parent=1 // pred_check_branch
      %12 = sbr.rel (0) target = $region5
    $region4: #{tpu_custom_call.1} parent=1 // pred_region
      %14 = vsyncadd [#allocation3], 0
      %s15 = sshll.u32 %s0, 4
      %s16 = int_to_ptr.hbm [resolvable:$true] %s15
      %s17 = sshll.u32 [#allocation2], 4
      %s18 = int_to_ptr.vmem [resolvable:$true] %s17
      %23 = dma.hbm_to_vmem [thread:$0]  %s16, 256, %s18, [#allocation3], 128, 128, 8
    $region5: #{tpu_custom_call.1} parent=1 // pred_fallthru
      _
    // Predicated region
    $region6: #{tpu_custom_call.1} parent=1 // pred_check
      _
    $region7: #{tpu_custom_call.1} parent=1 // pred_check_branch
      %25 = sbr.rel (0) target = $region9
    $region8: #{tpu_custom_call.1} parent=1 // pred_region
      %27 = vsyncadd [#allocation6], 0
      %s29 = sshll.u32 %s1, 4
      %s30 = int_to_ptr.hbm [resolvable:$true] %s29
      %s31 = sshll.u32 [#allocation5], 4
      %s32 = int_to_ptr.vmem [resolvable:$true] %s31
      %34 = dma.hbm_to_vmem [thread:$0]  %s30, 16, %s32, [#allocation6]
    $region9: #{tpu_custom_call.1} parent=1 // pred_fallthru
      _
    // Predicated region
    $region10: #{tpu_custom_call.1} parent=1 // pred_check
      _
    $region11: #{tpu_custom_call.1} parent=1 // pred_check_branch
      %36 = sbr.rel (0) target = $region13
    $region12: #{tpu_custom_call.1} parent=1 // pred_region
      _
    $region13: #{tpu_custom_call.1} parent=1 // pred_fallthru
      _
    // Predicated region
    $region14: #{tpu_custom_call.1} parent=1 // pred_check
      _
    $region15: #{tpu_custom_call.1} parent=1 // pred_check_branch
      %38 = sbr.rel (0) target = $region17
    $region16: #{tpu_custom_call.1} parent=1 // pred_region
      %40 = dma.done [#allocation3], 256
    $region17: #{tpu_custom_call.1} parent=1 // pred_fallthru
      _
    // Predicated region
    $region18: #{tpu_custom_call.1} parent=1 // pred_check
      _
    $region19: #{tpu_custom_call.1} parent=1 // pred_check_branch
      %42 = sbr.rel (0) target = $region21
    $region20: #{tpu_custom_call.1} parent=1 // pred_region
      %44 = dma.done [#allocation6], 16
    $region21: #{tpu_custom_call.1} parent=1 // pred_fallthru
      _
    %v45 = vld [vmem:[#allocation2] sm:$0xff]
    %v46 = vld [vmem:[#allocation2 + $0x8] sm:$0xff]
    %vm47 = vcmask 261120
    %v48 = vsel %vm47, %v45, 0.0
    %49 = vadd.xlane.f32.xlu0 %v48
    %v50 = vpop.xlane.xlu0 %49
    %v51 = vsel %vm47, %v46, 0.0
    %52 = vadd.xlane.f32.xlu0 %v51
    %v53 = vpop.xlane.xlu0 %52
    %v54 = vrcp.pop 32.0
    %v55 = vmul.f32 32.0, %v54
    %v56 = vsub.f32 1.0, %v55
    %v57 = vmul.f32 %v54, %v56
    %v58 = vadd.f32 %v54, %v57
    %vm59 = vweird.f32 %v54
    %v60 = vsel %vm59, %v54, %v58
    %v61 = vmul.f32 %v50, %v60
    %v62 = vmul.f32 %v53, %v60
    %v63 = vsub.f32 %v45, %v61
    %v64 = vsub.f32 %v46, %v62
    %v65 = vmul.f32 %v63, %v63
    %v66 = vmul.f32 %v64, %v64
    %v67 = vsel %vm47, %v65, 0.0
    %68 = vadd.xlane.f32.xlu0 %v67
    %v69 = vpop.xlane.xlu0 %68
    %v70 = vsel %vm47, %v66, 0.0
    %71 = vadd.xlane.f32.xlu0 %v70
    %v72 = vpop.xlane.xlu0 %71
    %v73 = vmul.f32 %v69, %v60
    %v74 = vmul.f32 %v72, %v60
    %v75 = vadd.f32 %v73, 1e-12
    %v76 = vadd.f32 %v74, 1e-12
    %v77 = vrsqrt.pop %v75
    %v78 = vmul.f32 %v77, %v75
    %v79 = vmul.f32 %v78, %v77
    %v80 = vmul.f32 0.5, %v79
    %v81 = vsub.f32 1.5, %v80
    %v82 = vmul.f32 %v77, %v81
    %vm83 = vweird.f32 %v75
    %vm84 = vweird.f32 %v77
    %vm85 = vmor %vm83, %vm84
    %v86 = vsel %vm85, %v77, %v82
    %v87 = vrsqrt.pop %v76
    %v88 = vmul.f32 %v87, %v76
    %v89 = vmul.f32 %v88, %v87
    %v90 = vmul.f32 0.5, %v89
    %v91 = vsub.f32 1.5, %v90
    %v92 = vmul.f32 %v87, %v91
    %vm93 = vweird.f32 %v76
    %vm94 = vweird.f32 %v87
    %vm95 = vmor %vm93, %vm94
    %v96 = vsel %vm95, %v87, %v92
    %v97 = vmul.f32 %v63, %v86
    %v98 = vmul.f32 %v64, %v96
    %v99 = vld [vmem:[#allocation5] sm:$0x1]
    %v101 = vperm.slane %v99, 0
    %v103 = vmul.f32 %v97, %v101
    %v104 = vmul.f32 %v98, %v101
    %v105 = vld [vmem:[%s2] sm:$0x1]
    %v107 = vperm.slane %v105, 0
    %v109 = vadd.f32 %v103, %v107
    %v110 = vadd.f32 %v104, %v107
    %v111 = vpack.c.bf16 %v109, %v109
    %v112 = vpack.c.bf16 %v110, %v110
    %vm113 = vcmask 257024
    %114 = vst.msk [vmem:[#allocation7] sm:$0xf] %vm113, %v111
    %115 = vst.msk [vmem:[#allocation7 + $0x4] sm:$0xf] %vm113, %v112
    // Predicated region
    $region22: #{tpu_custom_call.1} parent=1 // pred_check
      _
    $region23: #{tpu_custom_call.1} parent=1 // pred_check_branch
      %117 = sbr.rel (0) target = $region25
    $region24: #{tpu_custom_call.1} parent=1 // pred_region
      %119 = vsyncadd [#allocation4], 0
      %s120 = sshll.u32 [#allocation7], 4
      %s121 = int_to_ptr.vmem [resolvable:$true] %s120
      %s122 = sshll.u32 %s3, 4
      %s123 = int_to_ptr.hbm [resolvable:$true] %s122
      %128 = dma.vmem_to_hbm [thread:$0]  %s121, 128, %s123, [#allocation4], 64, 64, 4
    $region25: #{tpu_custom_call.1} parent=1 // pred_fallthru
      _
    // Predicated region
    $region26: #{tpu_custom_call.1} parent=1 // pred_check
      _
    $region27: #{tpu_custom_call.1} parent=1 // pred_check_branch
      %130 = sbr.rel (0) target = $region29
    $region28: #{tpu_custom_call.1} parent=1 // pred_region
      %132 = dma.done [#allocation4], 128
    $region29: #{tpu_custom_call.1} parent=1 // pred_fallthru
      _
    %133 = vsyncpa [#allocation3], 1
    %134 = vsyncpa [#allocation6], 1
    %135 = vsyncpa [#allocation4], 1

</llo_original>
